<compile_context>
chip_gen: v6e
topology: v6e:2x2x1
jax: 0.10.0
libtpu: 0.0.40
codegen_flags: <defaults>
</compile_context>

<pallas_src>
import math
import numpy as np

import jax
import jax.numpy as jnp
from jax.experimental import pallas as pl
from jax.experimental.pallas import tpu as pltpu


# --------------------------- wrapper-side helpers ----------------------------

def _round_up(x, m):
    return ((x + m - 1) // m) * m


def _tile(dim):
    # 256 tiles feed the 2x256 MXU (v6e/v7x) when the padded dim allows;
    # otherwise 128 (matches v5e's 4x128 MXU and any 128-but-not-256 dim).
    return 256 if dim % 256 == 0 else 128


def _pad2(x, rows, cols):
    return jnp.pad(x, ((0, rows - x.shape[0]), (0, cols - x.shape[1])))


def coo_to_dense(indices, values, shape):
    """Glue: scatter COO sparse matrix into dense (duplicates summed, matching
    torch_sparse.spmm coalescing semantics)."""
    dense = jnp.zeros(shape, jnp.float32)
    return dense.at[indices[0], indices[1]].add(values)


# --------------------------------- kernels -----------------------------------

def _feature_kernel(x_ref, w_ref, b_ref, o_ref, acc_ref):
    """o = relu(x @ w + b), tiled over (M, C, K) with an f32 accumulator."""
    @pl.when(pl.program_id(2) == 0)
    def _():
        acc_ref[...] = jnp.zeros_like(acc_ref)

    acc_ref[...] += jnp.dot(x_ref[...], w_ref[...],
                            preferred_element_type=jnp.float32)

    @pl.when(pl.program_id(2) == pl.num_programs(2) - 1)
    def _():
        h = acc_ref[...] + b_ref[...]            # (1, tn) f32 bias broadcast
        # TODO(synk): F.dropout is stochastic in training mode; implemented as
        # eval-mode identity (dropout_rate has no effect at inference).
        o_ref[...] = jnp.maximum(h, 0.0).astype(o_ref.dtype)


def _matmul_kernel(a_ref, h_ref, o_ref, acc_ref):
    """o = a @ h, tiled over (M, C, K) with an f32 accumulator."""
    @pl.when(pl.program_id(2) == 0)
    def _():
        acc_ref[...] = jnp.zeros_like(acc_ref)

    acc_ref[...] += jnp.dot(a_ref[...], h_ref[...],
                            preferred_element_type=jnp.float32)

    @pl.when(pl.program_id(2) == pl.num_programs(2) - 1)
    def _():
        o_ref[...] = acc_ref[...].astype(o_ref.dtype)


_COMPILER_PARAMS = pltpu.CompilerParams(
    dimension_semantics=("parallel", "parallel", "arbitrary"),
    vmem_limit_bytes=48 * 1024 * 1024,   # headroom under v7x's 64 MiB VMEM
)


# ------------------------------ pallas_call wrappers --------------------------

def _feature_transform(x_bf, w_bf, bias_f32, out_dtype):
    m, k = x_bf.shape
    _, c = w_bf.shape
    tm, tn, tk = _tile(m), _tile(c), _tile(k)
    grid = (m // tm, c // tn, k // tk)
    cost = pl.CostEstimate(
        flops=2 * m * k * c,
        transcendentals=0,
        bytes_accessed=(x_bf.size * 2 + w_bf.size * 2 + bias_f32.size * 4
                        + m * c * np.dtype(out_dtype).itemsize),
    )
    return pl.pallas_call(
        _feature_kernel,
        out_shape=jax.ShapeDtypeStruct((m, c), out_dtype),
        grid_spec=pltpu.PrefetchScalarGridSpec(
            num_scalar_prefetch=0,
            grid=grid,
            in_specs=[
                pl.BlockSpec((tm, tk), lambda i, j, kk: (i, kk)),
                pl.BlockSpec((tk, tn), lambda i, j, kk: (kk, j)),
                pl.BlockSpec((1, tn), lambda i, j, kk: (0, j)),
            ],
            out_specs=pl.BlockSpec((tm, tn), lambda i, j, kk: (i, j)),
            scratch_shapes=[pltpu.VMEM((tm, tn), jnp.float32)],
        ),
        compiler_params=_COMPILER_PARAMS,
        cost_estimate=cost,
    )(x_bf, w_bf, bias_f32)


def _propagate(a_bf, h_bf, out_dtype):
    m, k = a_bf.shape
    _, c = h_bf.shape
    tm, tn, tk = _tile(m), _tile(c), _tile(k)
    grid = (m // tm, c // tn, k // tk)
    cost = pl.CostEstimate(
        flops=2 * m * k * c,
        transcendentals=0,
        bytes_accessed=(a_bf.size * 2 + h_bf.size * 2
                        + m * c * np.dtype(out_dtype).itemsize),
    )
    return pl.pallas_call(
        _matmul_kernel,
        out_shape=jax.ShapeDtypeStruct((m, c), out_dtype),
        grid_spec=pltpu.PrefetchScalarGridSpec(
            num_scalar_prefetch=0,
            grid=grid,
            in_specs=[
                pl.BlockSpec((tm, tk), lambda i, j, kk: (i, kk)),
                pl.BlockSpec((tk, tn), lambda i, j, kk: (kk, j)),
            ],
            out_specs=pl.BlockSpec((tm, tn), lambda i, j, kk: (i, j)),
            scratch_shapes=[pltpu.VMEM((tm, tn), jnp.float32)],
        ),
        compiler_params=_COMPILER_PARAMS,
        cost_estimate=cost,
    )(a_bf, h_bf)


def sparse_ngcn_forward(adj_dense, x_dense, weight, bias, iterations):
    """SparseNGCNLayer.forward with densified sparse operands.

    adj_dense : (N, N) f32 normalized adjacency
    x_dense   : (N, F_in) f32 features
    weight    : (F_in, C) f32, bias : (1, C) f32
    returns   : (N, C) f32
    """
    n = adj_dense.shape[0]
    f_in, c = weight.shape

    n_pad = _round_up(n, 128)
    k_pad = _round_up(f_in, 128)
    c_pad = _round_up(c, 128)

    # Zero-pad to lane/sublane-aligned shapes; bf16 for MXU inputs.
    x_p = _pad2(x_dense, n_pad, k_pad).astype(jnp.bfloat16)
    w_p = _pad2(weight, k_pad, c_pad).astype(jnp.bfloat16)
    b_p = _pad2(bias, 1, c_pad)                       # f32 epilogue
    a_p = _pad2(adj_dense, n_pad, n_pad).astype(jnp.bfloat16)

    # H0 = relu(X @ W + b); keep bf16 only if it feeds another matmul.
    h = _feature_transform(
        x_p, w_p, b_p,
        out_dtype=jnp.float32 if iterations == 1 else jnp.bfloat16)

    # Propagation chain: H <- A_hat @ H, ping-ponged through HBM so the full H
    # never has to stay resident in VMEM; last step stores f32.
    for t in range(iterations - 1):
        last = (t == iterations - 2)
        h = _propagate(a_p, h,
                       out_dtype=jnp.float32 if last else jnp.bfloat16)

    return h[:n, :c]


# ----------------------------------- demo ------------------------------------

if __name__ == "__main__":
    # Small but non-trivial shapes: padded N=384 -> 3 row tiles and a 3-deep
    # K-reduction for the propagation kernel (exercises the accumulator path).
    N, F_IN, F_OUT, ITERS, DROPOUT = 300, 8, 32, 3, 0.5

    key = jax.random.PRNGKey(0)
    k_feat, k_adj, k_w, k_b = jax.random.split(key, 4)

    # --- sparse feature matrix in COO form (N, F_IN) -------------------------
    feat_dense_np = np.array(jax.random.uniform(k_feat, (N, F_IN)))
    mask = feat_dense_np > 0.5
    mask[N - 1, F_IN - 1] = True          # ensure max index == (N-1, F_IN-1)
    rows, cols = np.nonzero(mask)
    feat_indices = jnp.array(np.stack([rows, cols]), jnp.int32)   # (2, nnz)
    feat_values = jnp.array(feat_dense_np[rows, cols], jnp.float32)

    # --- normalized adjacency A_hat = D^-1 (A + I) in COO form ---------------
    adj_mask = np.array(jax.random.uniform(k_adj, (N, N))) > 0.9
    adj_mask = np.logical_or(adj_mask, adj_mask.T)
    np.fill_diagonal(adj_mask, True)
    deg = adj_mask.sum(axis=1, keepdims=True).astype(np.float32)
    adj_norm_np = adj_mask.astype(np.float32) / deg
    arows, acols = np.nonzero(adj_norm_np)
    adj_indices = jnp.array(np.stack([arows, acols]), jnp.int32)
    adj_values = jnp.array(adj_norm_np[arows, acols], jnp.float32)

    # --- parameters (deterministic xavier_uniform, matching torch fan rules) -
    bound_w = math.sqrt(6.0 / (F_IN + F_OUT))
    weight = jax.random.uniform(k_w, (F_IN, F_OUT), jnp.float32, -bound_w, bound_w)
    bound_b = math.sqrt(6.0 / (F_OUT + 1))   # bias (1, F_OUT): fan_in=F_OUT, fan_out=1
    bias = jax.random.uniform(k_b, (1, F_OUT), jnp.float32, -bound_b, bound_b)

    # Module computes feature_count = max(indices)+1; demo data guarantees it
    # equals (N, F_IN).  X is sized by N explicitly so A (N,N) @ H shape-checks.
    feature_count = jnp.max(feat_indices, axis=1) + 1
    assert int(feature_count[0]) == N and int(feature_count[1]) == F_IN

    # Glue: densify sparse operands (spmm(sparse, dense) == dense @ dense).
    x_dense = coo_to_dense(feat_indices, feat_values, (N, F_IN))
    adj_dense = coo_to_dense(adj_indices, adj_values, (N, N))

    out = sparse_ngcn_forward(adj_dense, x_dense, weight, bias, ITERS)
    out = jax.block_until_ready(out)

    # Pure-JAX reference with the same bf16-input / f32-accumulate strategy.
    x_bf = x_dense.astype(jnp.bfloat16)
    w_bf = weight.astype(jnp.bfloat16)
    a_bf = adj_dense.astype(jnp.bfloat16)
    ref = jnp.maximum(
        jnp.dot(x_bf, w_bf, preferred_element_type=jnp.float32) + bias, 0.0)
    for _ in range(ITERS - 1):
        ref = jnp.dot(a_bf, ref.astype(jnp.bfloat16),
                      preferred_element_type=jnp.float32)

    assert out.shape == (N, F_OUT)
    assert jnp.allclose(out, ref, atol=1e-2, rtol=1e-2), "mismatch vs reference"

    print("KERNEL_OK")
</pallas_src>

<mosaic_0001>
module attributes {stable_mosaic.version = 11 : i64} {
  func.func @_feature_kernel(%arg0: i32, %arg1: i32, %arg2: i32, %arg3: memref<128x128xbf16, #tpu.memory_space<vmem>>, %arg4: memref<128x128xbf16, #tpu.memory_space<vmem>>, %arg5: memref<1x128xf32, #tpu.memory_space<vmem>>, %arg6: memref<128x128xbf16, #tpu.memory_space<vmem>>, %arg7: memref<128x128xf32, #tpu.memory_space<vmem>>) attributes {dimension_semantics = [#tpu.dimension_semantics<parallel>, #tpu.dimension_semantics<parallel>, #tpu.dimension_semantics<arbitrary>], iteration_bounds = array<i64: 3, 1, 1>, scalar_prefetch = 0 : i64, scratch_operands = 1 : i64, tpu.core_type = #tpu.core_type<tc>, window_params = [{transform_indices = @transform_0, window_bounds = array<i64: 128, 128>}, {transform_indices = @transform_1, window_bounds = array<i64: 128, 128>}, {transform_indices = @transform_2, window_bounds = array<i64: 1, 128>}, {transform_indices = @transform_3, window_bounds = array<i64: 128, 128>}]} {
    %c0_i32 = arith.constant 0 : i32
    %0 = arith.cmpi eq, %arg2, %c0_i32 : i32
    %1 = arith.extui %0 : i1 to i32
    %c0_i32_0 = arith.constant 0 : i32
    %2 = arith.cmpi ne, %1, %c0_i32_0 : i32
    scf.if %2 {
      %cst_10 = arith.constant 0.000000e+00 : f32
      %12 = vector.broadcast %cst_10 : f32 to vector<128x128xf32>
      %c0_11 = arith.constant 0 : index
      %c0_12 = arith.constant 0 : index
      %13 = vector.load %arg7[%c0_11, %c0_12] : memref<128x128xf32, #tpu.memory_space<vmem>>, vector<128x128xf32>
      tpu.vector_store %arg7[%c0_11, %c0_12], %12 {strides = array<i32>} : memref<128x128xf32, #tpu.memory_space<vmem>>, vector<128x128xf32>,
    } else {
    }
    %c0 = arith.constant 0 : index
    %c0_1 = arith.constant 0 : index
    %3 = vector.load %arg7[%c0, %c0_1] : memref<128x128xf32, #tpu.memory_space<vmem>>, vector<128x128xf32>
    %c0_2 = arith.constant 0 : index
    %c0_3 = arith.constant 0 : index
    %4 = vector.load %arg3[%c0_2, %c0_3] : memref<128x128xbf16, #tpu.memory_space<vmem>>, vector<128x128xbf16>
    %c0_4 = arith.constant 0 : index
    %c0_5 = arith.constant 0 : index
    %5 = vector.load %arg4[%c0_4, %c0_5] : memref<128x128xbf16, #tpu.memory_space<vmem>>, vector<128x128xbf16>
    %cst = arith.constant dense<0.000000e+00> : vector<128x128xf32>
    %6 = tpu.matmul %4, %5, %cst {dimension_numbers = #tpu.dot_dimension_numbers<[1], [0], [0], [1], [0, 0, 1, 1], [], []>} : vector<128x128xbf16>, vector<128x128xbf16>, vector<128x128xf32> -> vector<128x128xf32>
    %7 = arith.addf %3, %6 : vector<128x128xf32>
    %c0_6 = arith.constant 0 : index
    %c0_7 = arith.constant 0 : index
    %8 = vector.load %arg7[%c0_6, %c0_7] : memref<128x128xf32, #tpu.memory_space<vmem>>, vector<128x128xf32>
    tpu.vector_store %arg7[%c0_6, %c0_7], %7 {strides = array<i32>} : memref<128x128xf32, #tpu.memory_space<vmem>>, vector<128x128xf32>,
    %c0_i32_8 = arith.constant 0 : i32
    %9 = arith.cmpi eq, %arg2, %c0_i32_8 : i32
    %10 = arith.extui %9 : i1 to i32
    %c0_i32_9 = arith.constant 0 : i32
    %11 = arith.cmpi ne, %10, %c0_i32_9 : i32
    scf.if %11 {
      %c0_10 = arith.constant 0 : index
      %c0_11 = arith.constant 0 : index
      %12 = vector.load %arg7[%c0_10, %c0_11] : memref<128x128xf32, #tpu.memory_space<vmem>>, vector<128x128xf32>
      %c0_12 = arith.constant 0 : index
      %c0_13 = arith.constant 0 : index
      %13 = vector.load %arg5[%c0_12, %c0_13] : memref<1x128xf32, #tpu.memory_space<vmem>>, vector<1x128xf32>
      %14 = vector.broadcast %13 : vector<1x128xf32> to vector<128x128xf32>
      %15 = arith.addf %12, %14 : vector<128x128xf32>
      %cst_14 = arith.constant 0.000000e+00 : f32
      %16 = vector.broadcast %cst_14 : f32 to vector<128x128xf32>
      %17 = arith.maximumf %15, %16 : vector<128x128xf32>
      %18 = arith.truncf %17 : vector<128x128xf32> to vector<128x128xbf16>
      %c0_15 = arith.constant 0 : index
      %c0_16 = arith.constant 0 : index
      %19 = vector.load %arg6[%c0_15, %c0_16] : memref<128x128xbf16, #tpu.memory_space<vmem>>, vector<128x128xbf16>
      tpu.vector_store %arg6[%c0_15, %c0_16], %18 {strides = array<i32>} : memref<128x128xbf16, #tpu.memory_space<vmem>>, vector<128x128xbf16>,
    } else {
    }
    return
  }
  func.func @transform_0(%arg0: i32, %arg1: i32, %arg2: i32) -> (i32, i32) {
    %c0_i32 = arith.constant 0 : i32
    return %arg0, %arg2 : i32, i32
  }
  func.func @transform_1(%arg0: i32, %arg1: i32, %arg2: i32) -> (i32, i32) {
    %c0_i32 = arith.constant 0 : i32
    return %arg2, %arg1 : i32, i32
  }
  func.func @transform_2(%arg0: i32, %arg1: i32, %arg2: i32) -> (i32, i32) {
    %c0_i32 = arith.constant 0 : i32
    %c0_i32_0 = arith.constant 0 : i32
    return %c0_i32, %arg1 : i32, i32
  }
  func.func @transform_3(%arg0: i32, %arg1: i32, %arg2: i32) -> (i32, i32) {
    %c0_i32 = arith.constant 0 : i32
    return %arg0, %arg1 : i32, i32
  }
}

</mosaic_0001>

<llo_original>
// kernel: tpu_custom_call.1
$region0: #{tpu_custom_call.1}
  #allocation0 [shape = 'u32[]', space=smem, size = 0x4, offset = 0x4, fixed_abs, tag = 'smem constant byte address 0x4 - core index']
  #allocation1 [shape = 'u32[144,128]{1,0:T(1,128)}', space=vmem, size = 0x12000, scoped, tag = 'internal scratch']
  #allocation2 [shape = 'f32[128,128]{1,0:T(8,128)}', space=vmem, size = 0x10000, scoped, tag = 'scratch operand']
  %s0 = inlined_call_operand.hbm [shape: bf16[384,128], index: 0, kind: input, shape index: {}]
  %s1 = inlined_call_operand.hbm [shape: bf16[128,128], index: 1, kind: input, shape index: {}]
  %s2 = inlined_call_operand.vmem [shape: f32[1,128], index: 2, kind: input, shape index: {}]
  %s3 = inlined_call_operand.hbm [shape: bf16[384,128], index: 3, kind: output, shape index: {}]
  %s4 = sld [smem:[#allocation0]]
  $region61: #{tpu_custom_call.1} parent=0
    _
  %s6 = ssub.s32 1, %s4
  %s7 = scalar_select 0, %s6, %s4
  $region1: #{tpu_custom_call.1} parent=0
    #allocation3 [shape = 'u8[65536]{0}', space=vmem, size = 0x10000, scoped, tag = 'input window, operand 0']
    #allocation4 [shape = 's32[2]{0}', space=sflag, size = 0x8, scoped, tag = 'scoped memory for tpu_custom_call.1']
    #allocation5 [shape = 's32[2]{0}', space=sflag, size = 0x8, scoped, tag = 'scoped memory for tpu_custom_call.1']
    #allocation6 [shape = 'u8[32768]{0}', space=vmem, size = 0x8000, scoped, tag = 'input window, operand 1, single buffered']
    #allocation7 [shape = 's32[1]{0}', space=sflag, size = 0x4, scoped, tag = 'scoped memory for tpu_custom_call.1']
    #allocation8 [shape = 'u8[65536]{0}', space=vmem, size = 0x10000, scoped, tag = 'output window, operand 0']
    %8 = vsyncpa [#allocation4], 0
    %s9 = scalar_lea.sflag [#allocation4], 1
    %10 = vsyncpa %s9, 0
    %11 = vsyncpa [#allocation7], 0
    %12 = vsyncpa [#allocation5], 0
    %s13 = scalar_lea.sflag [#allocation5], 1
    %14 = vsyncpa %s13, 0
    loop: start=0, step=1, limit=5
    $region2: #{tpu_custom_call.1} parent=1 // loop_pre_header
      _
    $region3: #{tpu_custom_call.1} parent=1 // loop_header
      %s16 = sphi 0, %s20
      %p17 = scmp.ge.s32.totalorder %s16, 5
      %s23 = sphi 0, %s42
      %s24 = sphi 0, %s38
      %s25 = sphi 0, %s34
      %s26 = sphi 0, %s23
      %s27 = sphi 0, %s24
      %s28 = sphi 0, %s25
      %s29 = sphi 0, %s26
      %s30 = sphi 0, %s27
      %s31 = sphi 0, %s28
      %s47 = sphi 0, %s49
      %s50 = sphi 0, %s47
      %s51 = sphi 0, %s50
      %s67 = sphi 0, %s51
      %s75 = sphi 0, %s77
      %s78 = sphi 0, %s75
      %s79 = sphi 0, %s78
      %s95 = sphi 0, %s79
      %s101 = sphi 0, %s103
      %s104 = sphi 0, %s101
      %s105 = sphi 0, %s104
      %s121 = sphi 0, %s105
      %s129 = sphi 0, %s131
      %s132 = sphi 0, %s129
      %s133 = sphi 0, %s132
      %s149 = sphi 0, %s133
    $region4: #{tpu_custom_call.1} parent=1 // loop_header_branch
      %19 = sbr.rel (%p17) target = $region8
    $region5: #{tpu_custom_call.1} parent=1 // loop_body
      %s21 = ssub.s32 %s16, 1
      %s22 = ssub.s32 %s16, 2
      %s32 = sadd.s32 1, %s25
      %p33 = scmp.ge.s32.totalorder %s32, 1
      %s34 = scalar_select %p33, 0, %s32
      %s35 = sadd.s32 1, %s24
      %s36 = scalar_select %p33, %s35, %s24
      %p37 = scmp.ge.s32.totalorder %s36, 1
      %s38 = scalar_select %p37, 0, %s36
      %s39 = sadd.s32 1, %s23
      %s40 = scalar_select %p37, %s39, %s23
      %p41 = scmp.ge.s32.totalorder %s40, 3
      %s42 = scalar_select %p41, 0, %s40
      %s43 = ssub.s32 %s23, %s42
      %s44 = ssub.s32 %s25, %s34
      %s45 = sor.u32 %s43, %s44
      %p46 = scmp.eq.s32.totalorder %s45, 0
      %s48 = sadd.s32 %s47, 1
      %s49 = scalar_select %p46, %s47, %s48
      %p52 = pneg %p46
      %p53 = scmp.eq.s32.totalorder %s16, 2
      %p54 = por %p52, %p53
      %p55 = scmp.ne.s32.totalorder %s47, %s50
      %p56 = scmp.eq.s32.totalorder %s16, 0
      %p57 = por %p55, %p56
      %p58 = scmp.ne.s32.totalorder %s47, %s50
      %p59 = scmp.eq.s32.totalorder %s21, 2
      %p60 = por %p58, %p59
      %p61 = scmp.ne.s32.totalorder %s50, %s51
      %p62 = scmp.eq.s32.totalorder %s21, 0
      %p63 = por %p61, %p62
      %p64 = scmp.ne.s32.totalorder %s50, %s51
      %p65 = scmp.eq.s32.totalorder %s22, 2
      %p66 = por %p64, %p65
      %p68 = scmp.ne.s32.totalorder %s51, %s67
      %p69 = scmp.eq.s32.totalorder %s22, 0
      %p70 = por %p68, %p69
      %s71 = ssub.s32 %s25, %s34
      %s72 = ssub.s32 %s24, %s38
      %s73 = sor.u32 %s71, %s72
      %p74 = scmp.eq.s32.totalorder %s73, 0
      %s76 = sadd.s32 %s75, 1
      %s77 = scalar_select %p74, %s75, %s76
      %p80 = pneg %p74
      %p81 = scmp.eq.s32.totalorder %s16, 2
      %p82 = por %p80, %p81
      %p83 = scmp.ne.s32.totalorder %s75, %s78
      %p84 = scmp.eq.s32.totalorder %s16, 0
      %p85 = por %p83, %p84
      %p86 = scmp.ne.s32.totalorder %s75, %s78
      %p87 = scmp.eq.s32.totalorder %s21, 2
      %p88 = por %p86, %p87
      %p89 = scmp.ne.s32.totalorder %s78, %s79
      %p90 = scmp.eq.s32.totalorder %s21, 0
      %p91 = por %p89, %p90
      %p92 = scmp.ne.s32.totalorder %s78, %s79
      %p93 = scmp.eq.s32.totalorder %s22, 2
      %p94 = por %p92, %p93
      %p96 = scmp.ne.s32.totalorder %s79, %s95
      %p97 = scmp.eq.s32.totalorder %s22, 0
      %p98 = por %p96, %p97
      %s99 = ssub.s32 %s24, %s38
      %p100 = scmp.eq.s32.totalorder %s99, 0
      %s102 = sadd.s32 %s101, 1
      %s103 = scalar_select %p100, %s101, %s102
      %p106 = pneg %p100
      %p107 = scmp.eq.s32.totalorder %s16, 2
      %p108 = por %p106, %p107
      %p109 = scmp.ne.s32.totalorder %s101, %s104
      %p110 = scmp.eq.s32.totalorder %s16, 0
      %p111 = por %p109, %p110
      %p112 = scmp.ne.s32.totalorder %s101, %s104
      %p113 = scmp.eq.s32.totalorder %s21, 2
      %p114 = por %p112, %p113
      %p115 = scmp.ne.s32.totalorder %s104, %s105
      %p116 = scmp.eq.s32.totalorder %s21, 0
      %p117 = por %p115, %p116
      %p118 = scmp.ne.s32.totalorder %s104, %s105
      %p119 = scmp.eq.s32.totalorder %s22, 2
      %p120 = por %p118, %p119
      %p122 = scmp.ne.s32.totalorder %s105, %s121
      %p123 = scmp.eq.s32.totalorder %s22, 0
      %p124 = por %p122, %p123
      %s125 = ssub.s32 %s23, %s42
      %s126 = ssub.s32 %s24, %s38
      %s127 = sor.u32 %s125, %s126
      %p128 = scmp.eq.s32.totalorder %s127, 0
      %s130 = sadd.s32 %s129, 1
      %s131 = scalar_select %p128, %s129, %s130
      %p134 = pneg %p128
      %p135 = scmp.eq.s32.totalorder %s16, 2
      %p136 = por %p134, %p135
      %p137 = scmp.ne.s32.totalorder %s129, %s132
      %p138 = scmp.eq.s32.totalorder %s16, 0
      %p139 = por %p137, %p138
      %p140 = scmp.ne.s32.totalorder %s129, %s132
      %p141 = scmp.eq.s32.totalorder %s21, 2
      %p142 = por %p140, %p141
      %p143 = scmp.ne.s32.totalorder %s132, %s133
      %p144 = scmp.eq.s32.totalorder %s21, 0
      %p145 = por %p143, %p144
      %p146 = scmp.ne.s32.totalorder %s132, %s133
      %p147 = scmp.eq.s32.totalorder %s22, 2
      %p148 = por %p146, %p147
      %p150 = scmp.ne.s32.totalorder %s133, %s149
      %p151 = scmp.eq.s32.totalorder %s22, 0
      %p152 = por %p150, %p151
      %p153 = scmp.le.s32.totalorder 1, %s16
      %p154 = scmp.lt.s32.totalorder %s16, 4
      %p155 = pnand %p153, %p154
      %p156 = pneg %p155
      // Predicated region
      $region9: #{tpu_custom_call.1} parent=5 // pred_check
        _
      $region10: #{tpu_custom_call.1} parent=5 // pred_check_branch
        %158 = sbr.rel (%p155) target = $region12
      $region11: #{tpu_custom_call.1} parent=5 // pred_region
        %s159 = ssub.s32 %s16, 1
        // Predicated region
        $region13: #{tpu_custom_call.1} parent=11 // pred_check
          %p160 = pneg %p91
        $region14: #{tpu_custom_call.1} parent=11 // pred_check_branch
          %162 = sbr.rel (%p160) target = $region16
        $region15: #{tpu_custom_call.1} parent=11 // pred_region
          %s163 = smul.u32 16, %s28
          %s165 = ssub.s32 1024, 1024
          %166 = vsyncadd [#allocation7], %s165
          %s167 = sadd.s32 %s27, %s163
          %s168 = smul.addr %s167, 64
          %s169 = scalar_lea.hbm %s1, %s168
          %s170 = sshll.u32 [#allocation6], 4
          %s171 = int_to_ptr.vmem [resolvable:$true] %s170
          %176 = dma.hbm_to_vmem [thread:$0]  %s169, 1024, %s171, [#allocation7], 64, 64, 4
        $region16: #{tpu_custom_call.1} parent=11 // pred_fallthru
          _
        // Predicated region
        $region17: #{tpu_custom_call.1} parent=11 // pred_check
          %p177 = pneg %p117
        $region18: #{tpu_custom_call.1} parent=11 // pred_check_branch
          %179 = sbr.rel (%p177) target = $region20
        $region19: #{tpu_custom_call.1} parent=11 // pred_region
          %p180 = scmp.lt.s32.totalorder %s27, 0
          %s181 = scalar_select %p180, %s27, 0
          %s182 = scalar_lea.vmem %s2, %s181
        $region20: #{tpu_custom_call.1} parent=11 // pred_fallthru
          _
      $region12: #{tpu_custom_call.1} parent=5 // pred_fallthru
        _
      %p183 = scmp.lt.s32.totalorder %s16, 3
      // Predicated region
      $region21: #{tpu_custom_call.1} parent=5 // pred_check
        %p184 = pneg %p183
      $region22: #{tpu_custom_call.1} parent=5 // pred_check_branch
        %186 = sbr.rel (%p184) target = $region24
      $region23: #{tpu_custom_call.1} parent=5 // pred_region
        // Predicated region
        $region25: #{tpu_custom_call.1} parent=23 // pred_check
          %p187 = pneg %p57
        $region26: #{tpu_custom_call.1} parent=23 // pred_check_branch
          %189 = sbr.rel (%p187) target = $region28
        $region27: #{tpu_custom_call.1} parent=23 // pred_region
          %s190 = sand.u32 %s47, 1
          %s191 = scalar_lea.sflag [#allocation4], %s190
          %s192 = sand.u32 %s47, 1
          %s193 = smul.addr %s192, 64
          %s194 = scalar_lea.vmem [#allocation3], %s193
          %s195 = smul.u32 16, %s23
          %s197 = ssub.s32 1024, 1024
          %198 = vsyncadd %s191, %s197
          %s199 = sadd.s32 %s25, %s195
          %s200 = smul.addr %s199, 64
          %s201 = scalar_lea.hbm %s0, %s200
          %s202 = sshll.u32 %s194, 4
          %s203 = int_to_ptr.vmem [resolvable:$true] %s202
          %208 = dma.hbm_to_vmem [thread:$0]  %s201, 1024, %s203, %s191, 64, 64, 4
        $region28: #{tpu_custom_call.1} parent=23 // pred_fallthru
          _
      $region24: #{tpu_custom_call.1} parent=5 // pred_fallthru
        _
      %p209 = scmp.le.s32.totalorder 1, %s16
      %p210 = scmp.lt.s32.totalorder %s16, 4
      %p211 = pnand %p209, %p210
      %p212 = pneg %p211
      // Predicated region
      $region29: #{tpu_custom_call.1} parent=5 // pred_check
        _
      $region30: #{tpu_custom_call.1} parent=5 // pred_check_branch
        %214 = sbr.rel (%p211) target = $region32
      $region31: #{tpu_custom_call.1} parent=5 // pred_region
        %s215 = ssub.s32 %s16, 1
        %s216 = sand.u32 %s50, 1
        %s217 = scalar_lea.sflag [#allocation4], %s216
        %s218 = sand.u32 %s50, 1
        %s219 = smul.addr %s218, 64
        %s220 = scalar_lea.vmem [#allocation3], %s219
        // Predicated region
        $region33: #{tpu_custom_call.1} parent=31 // pred_check
          %p221 = pneg %p63
        $region34: #{tpu_custom_call.1} parent=31 // pred_check_branch
          %223 = sbr.rel (%p221) target = $region36
        $region35: #{tpu_custom_call.1} parent=31 // pred_region
          %224 = dma.done %s217, 1024
        $region36: #{tpu_custom_call.1} parent=31 // pred_fallthru
          _
        // Predicated region
        $region37: #{tpu_custom_call.1} parent=31 // pred_check
          %p225 = pneg %p91
        $region38: #{tpu_custom_call.1} parent=31 // pred_check_branch
          %227 = sbr.rel (%p225) target = $region40
        $region39: #{tpu_custom_call.1} parent=31 // pred_region
          %228 = dma.done [#allocation7], 1024
        $region40: #{tpu_custom_call.1} parent=31 // pred_fallthru
          _
        %s229 = sand.u32 %s50, 1
        %s230 = scalar_lea.sflag [#allocation4], %s229
        %s231 = sand.u32 %s50, 1
        %s232 = smul.addr %s231, 64
        %s233 = scalar_lea.vmem [#allocation3], %s232
        %p234 = pneg %p63
        %p235 = pneg %p60
        %p236 = pneg %p91
        %p237 = pneg %p88
        %p238 = scmp.lt.s32.totalorder %s27, 0
        %s239 = scalar_select %p238, %s27, 0
        %s240 = scalar_lea.vmem %s2, %s239
        %p241 = pneg %p117
        %p242 = pneg %p114
        %p243 = pneg %p145
        %p244 = pneg %p142
        %s245 = sand.u32 %s132, 1
        %s246 = scalar_lea.sflag [#allocation5], %s245
        %s247 = sand.u32 %s132, 1
        %s248 = smul.addr %s247, 64
        %s249 = scalar_lea.vmem [#allocation8], %s248
        %s250 = smul.u32 16, %s26
        %s251 = smul.u32 16, %s28
        %p252 = scmp.lt.s32.totalorder %s27, 0
        %s253 = scalar_select %p252, %s27, 0
        %s254 = scalar_lea.vmem %s2, %s253
        %s255 = smul.u32 16, %s26
        %p257 = scmp.eq.s32.totalorder %s28, 0
        // Predicated region
        $region41: #{tpu_custom_call.1} parent=31 // pred_check
          %p258 = pneg %p257
        $region42: #{tpu_custom_call.1} parent=31 // pred_check_branch
          %260 = sbr.rel (%p258) target = $region44
        $region43: #{tpu_custom_call.1} parent=31 // pred_region
          %261 = vst [vmem:[#allocation2] sm:$0xff] 0.0
          %262 = vst [vmem:[#allocation2 + $0x8] sm:$0xff] 0.0
          %263 = vst [vmem:[#allocation2 + $0x10] sm:$0xff] 0.0
          %264 = vst [vmem:[#allocation2 + $0x18] sm:$0xff] 0.0
          %265 = vst [vmem:[#allocation2 + $0x20] sm:$0xff] 0.0
          %266 = vst [vmem:[#allocation2 + $0x28] sm:$0xff] 0.0
          %267 = vst [vmem:[#allocation2 + $0x30] sm:$0xff] 0.0
          %268 = vst [vmem:[#allocation2 + $0x38] sm:$0xff] 0.0
          %269 = vst [vmem:[#allocation2 + $0x40] sm:$0xff] 0.0
          %270 = vst [vmem:[#allocation2 + $0x48] sm:$0xff] 0.0
          %271 = vst [vmem:[#allocation2 + $0x50] sm:$0xff] 0.0
          %272 = vst [vmem:[#allocation2 + $0x58] sm:$0xff] 0.0
          %273 = vst [vmem:[#allocation2 + $0x60] sm:$0xff] 0.0
          %274 = vst [vmem:[#allocation2 + $0x68] sm:$0xff] 0.0
          %275 = vst [vmem:[#allocation2 + $0x70] sm:$0xff] 0.0
          %276 = vst [vmem:[#allocation2 + $0x78] sm:$0xff] 0.0
        $region44: #{tpu_custom_call.1} parent=31 // pred_fallthru
          _
        %v277 = vld [vmem:[#allocation2] sm:$0xff]
        %v278 = vld [vmem:[#allocation2 + $0x8] sm:$0xff]
        %v279 = vld [vmem:[#allocation2 + $0x10] sm:$0xff]
        %v280 = vld [vmem:[#allocation2 + $0x18] sm:$0xff]
        %v281 = vld [vmem:[#allocation2 + $0x20] sm:$0xff]
        %v282 = vld [vmem:[#allocation2 + $0x28] sm:$0xff]
        %v283 = vld [vmem:[#allocation2 + $0x30] sm:$0xff]
        %v284 = vld [vmem:[#allocation2 + $0x38] sm:$0xff]
        %v285 = vld [vmem:[#allocation2 + $0x40] sm:$0xff]
        %v286 = vld [vmem:[#allocation2 + $0x48] sm:$0xff]
        %v287 = vld [vmem:[#allocation2 + $0x50] sm:$0xff]
        %v288 = vld [vmem:[#allocation2 + $0x58] sm:$0xff]
        %v289 = vld [vmem:[#allocation2 + $0x60] sm:$0xff]
        %v290 = vld [vmem:[#allocation2 + $0x68] sm:$0xff]
        %v291 = vld [vmem:[#allocation2 + $0x70] sm:$0xff]
        %v292 = vld [vmem:[#allocation2 + $0x78] sm:$0xff]
        %v293 = vld [vmem:[%s220] sm:$0xf]
        %v294 = vld [vmem:[%s220 + $0x4] sm:$0xf]
        %v295 = vld [vmem:[%s220 + $0x8] sm:$0xf]
        %v296 = vld [vmem:[%s220 + $0xc] sm:$0xf]
        %v297 = vld [vmem:[%s220 + $0x10] sm:$0xf]
        %v298 = vld [vmem:[%s220 + $0x14] sm:$0xf]
        %v299 = vld [vmem:[%s220 + $0x18] sm:$0xf]
        %v300 = vld [vmem:[%s220 + $0x1c] sm:$0xf]
        %v301 = vld [vmem:[%s220 + $0x20] sm:$0xf]
        %v302 = vld [vmem:[%s220 + $0x24] sm:$0xf]
        %v303 = vld [vmem:[%s220 + $0x28] sm:$0xf]
        %v304 = vld [vmem:[%s220 + $0x2c] sm:$0xf]
        %v305 = vld [vmem:[%s220 + $0x30] sm:$0xf]
        %v306 = vld [vmem:[%s220 + $0x34] sm:$0xf]
        %v307 = vld [vmem:[%s220 + $0x38] sm:$0xf]
        %v308 = vld [vmem:[%s220 + $0x3c] sm:$0xf]
        %v309 = vld [vmem:[#allocation6] sm:$0xf]
        %v310 = vld [vmem:[#allocation6 + $0x4] sm:$0xf]
        %v311 = vld [vmem:[#allocation6 + $0x8] sm:$0xf]
        %v312 = vld [vmem:[#allocation6 + $0xc] sm:$0xf]
        %v313 = vld [vmem:[#allocation6 + $0x10] sm:$0xf]
        %v314 = vld [vmem:[#allocation6 + $0x14] sm:$0xf]
        %v315 = vld [vmem:[#allocation6 + $0x18] sm:$0xf]
        %v316 = vld [vmem:[#allocation6 + $0x1c] sm:$0xf]
        %v317 = vld [vmem:[#allocation6 + $0x20] sm:$0xf]
        %v318 = vld [vmem:[#allocation6 + $0x24] sm:$0xf]
        %v319 = vld [vmem:[#allocation6 + $0x28] sm:$0xf]
        %v320 = vld [vmem:[#allocation6 + $0x2c] sm:$0xf]
        %v321 = vld [vmem:[#allocation6 + $0x30] sm:$0xf]
        %v322 = vld [vmem:[#allocation6 + $0x34] sm:$0xf]
        %v323 = vld [vmem:[#allocation6 + $0x38] sm:$0xf]
        %v324 = vld [vmem:[#allocation6 + $0x3c] sm:$0xf]
        %v341 = vunpack.c.l.b16 %v293
        %v342 = vunpack.c.l.b16 %v294
        %v343 = vunpack.c.l.b16 %v295
        %v344 = vunpack.c.l.b16 %v296
        %v345 = vunpack.c.l.b16 %v297
        %v346 = vunpack.c.l.b16 %v298
        %v347 = vunpack.c.l.b16 %v299
        %v348 = vunpack.c.l.b16 %v300
        %v349 = vunpack.c.l.b16 %v301
        %v350 = vunpack.c.l.b16 %v302
        %v351 = vunpack.c.l.b16 %v303
        %v352 = vunpack.c.l.b16 %v304
        %v353 = vunpack.c.l.b16 %v305
        %v354 = vunpack.c.l.b16 %v306
        %v355 = vunpack.c.l.b16 %v307
        %v356 = vunpack.c.l.b16 %v308
        %v357 = vpack.c.b16 %v342, %v341
        %v358 = vpack.c.b16 %v344, %v343
        %v359 = vpack.c.b16 %v346, %v345
        %v360 = vpack.c.b16 %v348, %v347
        %v361 = vpack.c.b16 %v350, %v349
        %v362 = vpack.c.b16 %v352, %v351
        %v363 = vpack.c.b16 %v354, %v353
        %v364 = vpack.c.b16 %v356, %v355
        %v389 = vunpack.c.l.b16 %v309
        %v390 = vunpack.c.l.b16 %v310
        %v391 = vunpack.c.l.b16 %v311
        %v392 = vunpack.c.l.b16 %v312
        %v393 = vunpack.c.l.b16 %v313
        %v394 = vunpack.c.l.b16 %v314
        %v395 = vunpack.c.l.b16 %v315
        %v396 = vunpack.c.l.b16 %v316
        %v397 = vunpack.c.l.b16 %v317
        %v398 = vunpack.c.l.b16 %v318
        %v399 = vunpack.c.l.b16 %v319
        %v400 = vunpack.c.l.b16 %v320
        %v401 = vunpack.c.l.b16 %v321
        %v402 = vunpack.c.l.b16 %v322
        %v403 = vunpack.c.l.b16 %v323
        %v404 = vunpack.c.l.b16 %v324
        %v405 = vpack.c.b16 %v390, %v389
        %v406 = vpack.c.b16 %v392, %v391
        %v407 = vpack.c.b16 %v394, %v393
        %v408 = vpack.c.b16 %v396, %v395
        %v409 = vpack.c.b16 %v398, %v397
        %v410 = vpack.c.b16 %v400, %v399
        %v411 = vpack.c.b16 %v402, %v401
        %v412 = vpack.c.b16 %v404, %v403
        %421 = vmatprep.subr.bf16.mxu0 0
        %422 = vmatpush1.bf16.msra.mxu0 %v412
        %423 = vmatprep.subr.bf16.mxu0 0
        %424 = vmatpush1.bf16.msra.mxu0 %v411
        %425 = vmatprep.subr.bf16.mxu0 0
        %426 = vmatpush1.bf16.msra.mxu0 %v410
        %427 = vmatprep.subr.bf16.mxu0 0
        %428 = vmatpush1.bf16.msra.mxu0 %v409
        %429 = vmatprep.subr.bf16.mxu0 0
        %430 = vmatpush1.bf16.msra.mxu0 %v408
        %431 = vmatprep.subr.bf16.mxu0 0
        %432 = vmatpush1.bf16.msra.mxu0 %v407
        %433 = vmatprep.subr.bf16.mxu0 0
        %434 = vmatpush1.bf16.msra.mxu0 %v406
        %435 = vmatprep.subr.bf16.mxu0 0
        %436 = vmatpush1.bf16.msra.mxu0 %v405
        %437 = vmatprep.subr.bf16.mxu0 0
        %438 = vmatpush2.bf16.msra.mxu0 0
        %439 = vmatprep.subr.bf16.mxu0 0
        %440 = vmatpush2.bf16.msra.mxu0 0
        %441 = vmatprep.subr.bf16.mxu0 0
        %442 = vmatpush2.bf16.msra.mxu0 0
        %443 = vmatprep.subr.bf16.mxu0 0
        %444 = vmatpush2.bf16.msra.mxu0 0
        %445 = vmatprep.subr.bf16.mxu0 0
        %446 = vmatpush2.bf16.msra.mxu0 0
        %447 = vmatprep.subr.bf16.mxu0 0
        %448 = vmatpush2.bf16.msra.mxu0 0
        %449 = vmatprep.subr.bf16.mxu0 0
        %450 = vmatpush2.bf16.msra.mxu0 0
        %451 = vmatprep.subr.bf16.mxu0 0
        %452 = vmatpush2.bf16.msra.mxu0 0
        %453 = vmatprep.mubr.bf16.mxu0 0
        %454 = vmatmul.mubr.bf16.gmra.mxu0 %v357
        %v455 = vpop.f32.mrf.mxu0
        %v456 = vadd.f32 0.0, %v455
        %v457 = vpop.f32.mrf.mxu0
        %v458 = vpop.f32.mrf.mxu0
        %v459 = vadd.f32 0.0, %v458
        %v460 = vpop.f32.mrf.mxu0
        %461 = vmatprep.mubr.bf16.mxu0 0
        %462 = vmatmul.mubr.bf16.gmra.mxu0 %v358
        %v463 = vpop.f32.mrf.mxu0
        %v464 = vadd.f32 0.0, %v463
        %v465 = vpop.f32.mrf.mxu0
        %v466 = vpop.f32.mrf.mxu0
        %v467 = vadd.f32 0.0, %v466
        %v468 = vpop.f32.mrf.mxu0
        %469 = vmatprep.mubr.bf16.mxu0 0
        %470 = vmatmul.mubr.bf16.gmra.mxu0 %v359
        %v471 = vpop.f32.mrf.mxu0
        %v472 = vadd.f32 0.0, %v471
        %v473 = vpop.f32.mrf.mxu0
        %v474 = vpop.f32.mrf.mxu0
        %v475 = vadd.f32 0.0, %v474
        %v476 = vpop.f32.mrf.mxu0
        %477 = vmatprep.mubr.bf16.mxu0 0
        %478 = vmatmul.mubr.bf16.gmra.mxu0 %v360
        %v479 = vpop.f32.mrf.mxu0
        %v480 = vadd.f32 0.0, %v479
        %v481 = vpop.f32.mrf.mxu0
        %v482 = vpop.f32.mrf.mxu0
        %v483 = vadd.f32 0.0, %v482
        %v484 = vpop.f32.mrf.mxu0
        %485 = vmatprep.mubr.bf16.mxu0 0
        %486 = vmatmul.mubr.bf16.gmra.mxu0 %v361
        %v487 = vpop.f32.mrf.mxu0
        %v488 = vadd.f32 0.0, %v487
        %v489 = vpop.f32.mrf.mxu0
        %v490 = vpop.f32.mrf.mxu0
        %v491 = vadd.f32 0.0, %v490
        %v492 = vpop.f32.mrf.mxu0
        %493 = vmatprep.mubr.bf16.mxu0 0
        %494 = vmatmul.mubr.bf16.gmra.mxu0 %v362
        %v495 = vpop.f32.mrf.mxu0
        %v496 = vadd.f32 0.0, %v495
        %v497 = vpop.f32.mrf.mxu0
        %v498 = vpop.f32.mrf.mxu0
        %v499 = vadd.f32 0.0, %v498
        %v500 = vpop.f32.mrf.mxu0
        %501 = vmatprep.mubr.bf16.mxu0 0
        %502 = vmatmul.mubr.bf16.gmra.mxu0 %v363
        %v503 = vpop.f32.mrf.mxu0
        %v504 = vadd.f32 0.0, %v503
        %v505 = vpop.f32.mrf.mxu0
        %v506 = vpop.f32.mrf.mxu0
        %v507 = vadd.f32 0.0, %v506
        %v508 = vpop.f32.mrf.mxu0
        %509 = vmatprep.mubr.bf16.mxu0 0
        %510 = vmatmul.mubr.bf16.gmra.mxu0 %v364
        %v511 = vpop.f32.mrf.mxu0
        %v512 = vadd.f32 0.0, %v511
        %v513 = vpop.f32.mrf.mxu0
        %v514 = vpop.f32.mrf.mxu0
        %v515 = vadd.f32 0.0, %v514
        %v516 = vpop.f32.mrf.mxu0
        %517 = vdwg.mxu0
        %v518 = vadd.f32 %v277, %v456
        %v519 = vadd.f32 %v278, %v459
        %v520 = vadd.f32 %v279, %v464
        %v521 = vadd.f32 %v280, %v467
        %v522 = vadd.f32 %v281, %v472
        %v523 = vadd.f32 %v282, %v475
        %v524 = vadd.f32 %v283, %v480
        %v525 = vadd.f32 %v284, %v483
        %v526 = vadd.f32 %v285, %v488
        %v527 = vadd.f32 %v286, %v491
        %v528 = vadd.f32 %v287, %v496
        %v529 = vadd.f32 %v288, %v499
        %v530 = vadd.f32 %v289, %v504
        %v531 = vadd.f32 %v290, %v507
        %v532 = vadd.f32 %v291, %v512
        %v533 = vadd.f32 %v292, %v515
        %534 = vst [vmem:[#allocation2] sm:$0xff] %v518
        %535 = vst [vmem:[#allocation2 + $0x8] sm:$0xff] %v519
        %536 = vst [vmem:[#allocation2 + $0x10] sm:$0xff] %v520
        %537 = vst [vmem:[#allocation2 + $0x18] sm:$0xff] %v521
        %538 = vst [vmem:[#allocation2 + $0x20] sm:$0xff] %v522
        %539 = vst [vmem:[#allocation2 + $0x28] sm:$0xff] %v523
        %540 = vst [vmem:[#allocation2 + $0x30] sm:$0xff] %v524
        %541 = vst [vmem:[#allocation2 + $0x38] sm:$0xff] %v525
        %542 = vst [vmem:[#allocation2 + $0x40] sm:$0xff] %v526
        %543 = vst [vmem:[#allocation2 + $0x48] sm:$0xff] %v527
        %544 = vst [vmem:[#allocation2 + $0x50] sm:$0xff] %v528
        %545 = vst [vmem:[#allocation2 + $0x58] sm:$0xff] %v529
        %546 = vst [vmem:[#allocation2 + $0x60] sm:$0xff] %v530
        %547 = vst [vmem:[#allocation2 + $0x68] sm:$0xff] %v531
        %548 = vst [vmem:[#allocation2 + $0x70] sm:$0xff] %v532
        %549 = vst [vmem:[#allocation2 + $0x78] sm:$0xff] %v533
        // Predicated region
        $region45: #{tpu_custom_call.1} parent=31 // pred_check
          %p550 = pneg %p257
        $region46: #{tpu_custom_call.1} parent=31 // pred_check_branch
          %552 = sbr.rel (%p550) target = $region48
        $region47: #{tpu_custom_call.1} parent=31 // pred_region
          %v553 = vld [vmem:[#allocation2] sm:$0xff]
          %v554 = vld [vmem:[#allocation2 + $0x8] sm:$0xff]
          %v555 = vld [vmem:[#allocation2 + $0x10] sm:$0xff]
          %v556 = vld [vmem:[#allocation2 + $0x18] sm:$0xff]
          %v557 = vld [vmem:[#allocation2 + $0x20] sm:$0xff]
          %v558 = vld [vmem:[#allocation2 + $0x28] sm:$0xff]
          %v559 = vld [vmem:[#allocation2 + $0x30] sm:$0xff]
          %v560 = vld [vmem:[#allocation2 + $0x38] sm:$0xff]
          %v561 = vld [vmem:[#allocation2 + $0x40] sm:$0xff]
          %v562 = vld [vmem:[#allocation2 + $0x48] sm:$0xff]
          %v563 = vld [vmem:[#allocation2 + $0x50] sm:$0xff]
          %v564 = vld [vmem:[#allocation2 + $0x58] sm:$0xff]
          %v565 = vld [vmem:[#allocation2 + $0x60] sm:$0xff]
          %v566 = vld [vmem:[#allocation2 + $0x68] sm:$0xff]
          %v567 = vld [vmem:[#allocation2 + $0x70] sm:$0xff]
          %v568 = vld [vmem:[#allocation2 + $0x78] sm:$0xff]
          %v569 = vld [vmem:[%s254] sm:$0x1]
          %v571 = vlaneseq
          %v572 = vshrl.u32 %v571, 7
          %v573 = vsub.s32 0, %v572
          %v574 = vrot.slane %v569, %v573
          %v576 = vadd.f32 %v553, %v574
          %v577 = vadd.f32 %v554, %v574
          %v578 = vadd.f32 %v555, %v574
          %v579 = vadd.f32 %v556, %v574
          %v580 = vadd.f32 %v557, %v574
          %v581 = vadd.f32 %v558, %v574
          %v582 = vadd.f32 %v559, %v574
          %v583 = vadd.f32 %v560, %v574
          %v584 = vadd.f32 %v561, %v574
          %v585 = vadd.f32 %v562, %v574
          %v586 = vadd.f32 %v563, %v574
          %v587 = vadd.f32 %v564, %v574
          %v588 = vadd.f32 %v565, %v574
          %v589 = vadd.f32 %v566, %v574
          %v590 = vadd.f32 %v567, %v574
          %v591 = vadd.f32 %v568, %v574
          %v592 = vmax.f32 %v576, 0.0
          %v593 = vmax.f32 %v577, 0.0
          %v594 = vmax.f32 %v578, 0.0
          %v595 = vmax.f32 %v579, 0.0
          %v596 = vmax.f32 %v580, 0.0
          %v597 = vmax.f32 %v581, 0.0
          %v598 = vmax.f32 %v582, 0.0
          %v599 = vmax.f32 %v583, 0.0
          %v600 = vmax.f32 %v584, 0.0
          %v601 = vmax.f32 %v585, 0.0
          %v602 = vmax.f32 %v586, 0.0
          %v603 = vmax.f32 %v587, 0.0
          %v604 = vmax.f32 %v588, 0.0
          %v605 = vmax.f32 %v589, 0.0
          %v606 = vmax.f32 %v590, 0.0
          %v607 = vmax.f32 %v591, 0.0
          %v608 = vpack.c.bf16 %v593, %v592
          %v609 = vpack.c.bf16 %v595, %v594
          %v610 = vpack.c.bf16 %v597, %v596
          %v611 = vpack.c.bf16 %v599, %v598
          %v612 = vpack.c.bf16 %v601, %v600
          %v613 = vpack.c.bf16 %v603, %v602
          %v614 = vpack.c.bf16 %v605, %v604
          %v615 = vpack.c.bf16 %v607, %v606
          %v624 = vunpack.c.l.b16 %v608
          %v625 = vunpack.c.h.b16 %v608
          %v626 = vunpack.c.l.b16 %v609
          %v627 = vunpack.c.h.b16 %v609
          %v628 = vunpack.c.l.b16 %v610
          %v629 = vunpack.c.h.b16 %v610
          %v630 = vunpack.c.l.b16 %v611
          %v631 = vunpack.c.h.b16 %v611
          %v632 = vunpack.c.l.b16 %v612
          %v633 = vunpack.c.h.b16 %v612
          %v634 = vunpack.c.l.b16 %v613
          %v635 = vunpack.c.h.b16 %v613
          %v636 = vunpack.c.l.b16 %v614
          %v637 = vunpack.c.h.b16 %v614
          %v638 = vunpack.c.l.b16 %v615
          %v639 = vunpack.c.h.b16 %v615
          %v640 = vpack.c.b16 %v624, %v624
          %v641 = vpack.c.b16 %v625, %v625
          %v642 = vpack.c.b16 %v626, %v626
          %v643 = vpack.c.b16 %v627, %v627
          %v644 = vpack.c.b16 %v628, %v628
          %v645 = vpack.c.b16 %v629, %v629
          %v646 = vpack.c.b16 %v630, %v630
          %v647 = vpack.c.b16 %v631, %v631
          %v648 = vpack.c.b16 %v632, %v632
          %v649 = vpack.c.b16 %v633, %v633
          %v650 = vpack.c.b16 %v634, %v634
          %v651 = vpack.c.b16 %v635, %v635
          %v652 = vpack.c.b16 %v636, %v636
          %v653 = vpack.c.b16 %v637, %v637
          %v654 = vpack.c.b16 %v638, %v638
          %v655 = vpack.c.b16 %v639, %v639
          %672 = vst [vmem:[%s249] sm:$0xf] %v640
          %673 = vst [vmem:[%s249 + $0x4] sm:$0xf] %v641
          %674 = vst [vmem:[%s249 + $0x8] sm:$0xf] %v642
          %675 = vst [vmem:[%s249 + $0xc] sm:$0xf] %v643
          %676 = vst [vmem:[%s249 + $0x10] sm:$0xf] %v644
          %677 = vst [vmem:[%s249 + $0x14] sm:$0xf] %v645
          %678 = vst [vmem:[%s249 + $0x18] sm:$0xf] %v646
          %679 = vst [vmem:[%s249 + $0x1c] sm:$0xf] %v647
          %680 = vst [vmem:[%s249 + $0x20] sm:$0xf] %v648
          %681 = vst [vmem:[%s249 + $0x24] sm:$0xf] %v649
          %682 = vst [vmem:[%s249 + $0x28] sm:$0xf] %v650
          %683 = vst [vmem:[%s249 + $0x2c] sm:$0xf] %v651
          %684 = vst [vmem:[%s249 + $0x30] sm:$0xf] %v652
          %685 = vst [vmem:[%s249 + $0x34] sm:$0xf] %v653
          %686 = vst [vmem:[%s249 + $0x38] sm:$0xf] %v654
          %687 = vst [vmem:[%s249 + $0x3c] sm:$0xf] %v655
        $region48: #{tpu_custom_call.1} parent=31 // pred_fallthru
          _
        %s688 = sand.u32 %s132, 1
        %s689 = scalar_lea.sflag [#allocation5], %s688
        %s690 = sand.u32 %s132, 1
        %s691 = smul.addr %s690, 64
        %s692 = scalar_lea.vmem [#allocation8], %s691
        // Predicated region
        $region49: #{tpu_custom_call.1} parent=31 // pred_check
          %p693 = pneg %p142
        $region50: #{tpu_custom_call.1} parent=31 // pred_check_branch
          %695 = sbr.rel (%p693) target = $region52
        $region51: #{tpu_custom_call.1} parent=31 // pred_region
          %s696 = smul.u32 16, %s26
          %s698 = ssub.s32 1024, 1024
          %699 = vsyncadd %s689, %s698
          %s700 = sadd.s32 %s27, %s696
          %s701 = smul.addr %s700, 64
          %s702 = scalar_lea.hbm %s3, %s701
          %s703 = sshll.u32 %s692, 4
          %s704 = int_to_ptr.vmem [resolvable:$true] %s703
          %709 = dma.vmem_to_hbm [thread:$0]  %s704, 1024, %s702, %s689, 64, 64, 4
        $region52: #{tpu_custom_call.1} parent=31 // pred_fallthru
          _
      $region32: #{tpu_custom_call.1} parent=5 // pred_fallthru
        _
      %p710 = scmp.le.s32.totalorder 2, %s16
      // Predicated region
      $region53: #{tpu_custom_call.1} parent=5 // pred_check
        %p711 = pneg %p710
      $region54: #{tpu_custom_call.1} parent=5 // pred_check_branch
        %713 = sbr.rel (%p711) target = $region56
      $region55: #{tpu_custom_call.1} parent=5 // pred_region
        %s714 = ssub.s32 %s16, 2
        // Predicated region
        $region57: #{tpu_custom_call.1} parent=55 // pred_check
          %p715 = pneg %p148
        $region58: #{tpu_custom_call.1} parent=55 // pred_check_branch
          %717 = sbr.rel (%p715) target = $region60
        $region59: #{tpu_custom_call.1} parent=55 // pred_region
          %s718 = sand.u32 %s133, 1
          %s719 = scalar_lea.sflag [#allocation5], %s718
          %s720 = sand.u32 %s133, 1
          %s721 = smul.addr %s720, 64
          %s722 = scalar_lea.vmem [#allocation8], %s721
          %723 = dma.done %s719, 1024
        $region60: #{tpu_custom_call.1} parent=55 // pred_fallthru
          _
      $region56: #{tpu_custom_call.1} parent=5 // pred_fallthru
        _
    $region6: #{tpu_custom_call.1} parent=1 // loop_footer
      %s20 = sadd.s32 1, %s16
    $region7: #{tpu_custom_call.1} parent=1 // loop_footer_branch
      %15 = sbr.rel target = $region3
    $region8: #{tpu_custom_call.1} parent=1 // loop_exit
      _
    %724 = vsyncpa [#allocation4], 1
    %s725 = scalar_lea.sflag [#allocation4], 1
    %726 = vsyncpa %s725, 1
    %727 = vsyncpa [#allocation7], 1
    %728 = vsyncpa [#allocation5], 1
    %s729 = scalar_lea.sflag [#allocation5], 1
    %730 = vsyncpa %s729, 1

</llo_original>
